<compile_context>
chip_gen: v5e
topology: v5e:2x2
jax: 0.10.0
libtpu: 0.0.40
codegen_flags: <defaults>
</compile_context>

<pallas_src>
import jax
import jax.numpy as jnp
from jax.experimental import pallas as pl
from jax.experimental.pallas import tpu as pltpu


_SQRT_2_OVER_PI = 0.7978845608028654


def _round_up(n, m):
    return ((n + m - 1) // m) * m


def _feedforward_kernel(x_ref, w1_ref, b1_ref, w2_ref, b2_ref, o_ref):
    """One row tile: o = gelu(x @ W1 + b1) @ (diag(idx) @ W2) + b2."""
    x = x_ref[...]                                                  # (TM, dim) bf16

    # First matmul: bf16 x bf16 -> fp32 accumulate on the MXU.
    h = jnp.dot(x, w1_ref[...], preferred_element_type=jnp.float32)
    h = h + b1_ref[...]                                             # (1, hidden) broadcast

    # TODO(synk): PyTorch nn.GELU() defaults to the exact erf formulation; the
    # tanh approximation is used here (tanh has a guaranteed EUP lowering on
    # TPU; max abs deviation ~1e-3).  GELU polynomial kept in fp32.
    h = 0.5 * h * (1.0 + jnp.tanh(_SQRT_2_OVER_PI * (h + 0.044715 * h * h * h)))

    # Second matmul (channel-selection already folded into W2 by the wrapper).
    y = jnp.dot(h.astype(jnp.bfloat16), w2_ref[...],
                preferred_element_type=jnp.float32)
    y = y + b2_ref[...]                                             # (1, dim) broadcast
    o_ref[...] = y.astype(o_ref.dtype)


def _scoped_vmem_bytes(tm, dim, hidden, out_itemsize):
    weights = 2 * dim * hidden * 2              # W1 + W2 in bf16, single-buffered
    biases = (hidden + dim) * 4 * 2             # fp32 biases (generous)
    stream = 2 * tm * dim * (2 + out_itemsize)  # double-buffered bf16 x + out tiles
    interm = tm * hidden * (4 + 2)              # fp32 h + bf16 h inside the body
    total = weights + biases + stream + interm
    # 2x margin + slack, clamped to a range safe on v5e/v6e/v7x.
    return max(32 << 20, min(2 * total + (8 << 20), 96 << 20))


def feedforward_forward(x, w1, b1, indexes, w2, b2, *, tile_m=512):
    """x: (B, N, dim); w1: (dim, hidden); b1, indexes: (hidden,); w2: (hidden, dim); b2: (dim,)."""
    B, N, dim = x.shape
    dim_in, hidden = w1.shape
    assert dim_in == dim and w2.shape == (hidden, dim)
    assert b1.shape == (hidden,) and indexes.shape == (hidden,) and b2.shape == (dim,)

    # Flatten (B, N) -> M rows; stream row tiles, keep weights VMEM-resident.
    M = B * N
    x2 = x.reshape(M, dim).astype(jnp.bfloat16)
    w1b = w1.astype(jnp.bfloat16)
    # Fold the pruning mask into W2 (exact algebraic identity), then cast.
    w2b = (indexes.astype(jnp.float32)[:, None] * w2.astype(jnp.float32)).astype(jnp.bfloat16)
    b1r = b1.reshape(1, hidden).astype(jnp.float32)
    b2r = b2.reshape(1, dim).astype(jnp.float32)

    # Row tile: multiple of 8 (sublane), and force >= 2 grid steps when M
    # permits so the 'parallel' axis can shard across v7x's two TensorCores.
    tm = min(tile_m, _round_up(M, 8))
    if pl.cdiv(M, tm) < 2 and M > 8:
        tm = _round_up(pl.cdiv(M, 2), 8)
    grid_m = pl.cdiv(M, tm)

    out_dtype = x.dtype
    vmem_bytes = _scoped_vmem_bytes(tm, dim, hidden, jnp.dtype(out_dtype).itemsize)

    resident = dict(pipeline_mode=pl.Buffered(1))  # constant index_map -> single buffer

    out2 = pl.pallas_call(
        _feedforward_kernel,
        out_shape=jax.ShapeDtypeStruct((M, dim), out_dtype),
        grid_spec=pltpu.PrefetchScalarGridSpec(
            num_scalar_prefetch=0,
            grid=(grid_m,),
            in_specs=[
                pl.BlockSpec((tm, dim), lambda r: (r, 0)),                    # x rows (streamed)
                pl.BlockSpec((dim, hidden), lambda r: (0, 0), **resident),    # W1 (resident)
                pl.BlockSpec((1, hidden), lambda r: (0, 0), **resident),      # b1
                pl.BlockSpec((hidden, dim), lambda r: (0, 0), **resident),    # W2 * idx (resident)
                pl.BlockSpec((1, dim), lambda r: (0, 0), **resident),         # b2
            ],
            out_specs=pl.BlockSpec((tm, dim), lambda r: (r, 0)),
        ),
        compiler_params=pltpu.CompilerParams(
            dimension_semantics=("parallel",),
            vmem_limit_bytes=vmem_bytes,
        ),
    )(x2, w1b, b1r, w2b, b2r)

    return out2.reshape(B, N, dim)


if __name__ == "__main__":
    key = jax.random.PRNGKey(0)
    k_x, k_w1, k_b1, k_w2, k_b2 = jax.random.split(key, 5)

    # Small, lane-aligned shapes consistent with the module:
    # (B, num_patches + 1, dim) with dim=128, hidden_dim=256.
    B, N, dim, hidden = 2, 17, 128, 256

    x = jax.random.normal(k_x, (B, N, dim), dtype=jnp.float32)
    w1 = jax.random.normal(k_w1, (dim, hidden), dtype=jnp.float32) / jnp.sqrt(float(dim))
    b1 = jax.random.normal(k_b1, (hidden,), dtype=jnp.float32) * 0.01
    w2 = jax.random.normal(k_w2, (hidden, dim), dtype=jnp.float32) / jnp.sqrt(float(hidden))
    b2 = jax.random.normal(k_b2, (dim,), dtype=jnp.float32) * 0.01

    # channel_selection parameter is initialized to ones; zero a few channels
    # to emulate pruning and actually exercise the selection path.
    indexes = jnp.ones((hidden,), dtype=jnp.float32).at[::7].set(0.0)

    out = feedforward_forward(x, w1, b1, indexes, w2, b2)
    out = jax.block_until_ready(out)
    assert out.shape == (B, N, dim)

    # Pure-JAX reference mirroring the kernel numerics
    # (bf16 matmuls with fp32 accumulation, tanh-approx GELU, mask folded into W2).
    xb = x.reshape(-1, dim).astype(jnp.bfloat16)
    w1b = w1.astype(jnp.bfloat16)
    w2b = (indexes[:, None] * w2).astype(jnp.bfloat16)
    h_ref = jnp.dot(xb, w1b, preferred_element_type=jnp.float32) + b1
    h_ref = 0.5 * h_ref * (1.0 + jnp.tanh(_SQRT_2_OVER_PI * (h_ref + 0.044715 * h_ref ** 3)))
    ref = jnp.dot(h_ref.astype(jnp.bfloat16), w2b, preferred_element_type=jnp.float32) + b2
    ref = ref.reshape(B, N, dim)

    max_err = float(jnp.max(jnp.abs(out - ref)))
    assert jnp.allclose(out, ref, atol=2e-2, rtol=2e-2), f"max abs err = {max_err}"

    print("KERNEL_OK")
</pallas_src>

<mosaic_0001>
module attributes {stable_mosaic.version = 11 : i64} {
  func.func @_feedforward_kernel(%arg0: i32, %arg1: memref<24x128xbf16, #tpu.memory_space<vmem>>, %arg2: memref<128x256xbf16, #tpu.memory_space<vmem>>, %arg3: memref<1x256xf32, #tpu.memory_space<vmem>>, %arg4: memref<256x128xbf16, #tpu.memory_space<vmem>>, %arg5: memref<1x128xf32, #tpu.memory_space<vmem>>, %arg6: memref<24x128xf32, #tpu.memory_space<vmem>>) attributes {dimension_semantics = [#tpu.dimension_semantics<parallel>], iteration_bounds = array<i64: 2>, scalar_prefetch = 0 : i64, scratch_operands = 0 : i64, tpu.core_type = #tpu.core_type<tc>, window_params = [{transform_indices = @transform_0, window_bounds = array<i64: 24, 128>}, {pipeline_mode = #tpu.pipeline_mode<synchronous>, transform_indices = @transform_1, window_bounds = array<i64: 128, 256>}, {pipeline_mode = #tpu.pipeline_mode<synchronous>, transform_indices = @transform_2, window_bounds = array<i64: 1, 256>}, {pipeline_mode = #tpu.pipeline_mode<synchronous>, transform_indices = @transform_3, window_bounds = array<i64: 256, 128>}, {pipeline_mode = #tpu.pipeline_mode<synchronous>, transform_indices = @transform_4, window_bounds = array<i64: 1, 128>}, {transform_indices = @transform_5, window_bounds = array<i64: 24, 128>}]} {
    %c0 = arith.constant 0 : index
    %c0_0 = arith.constant 0 : index
    %0 = vector.load %arg1[%c0, %c0_0] : memref<24x128xbf16, #tpu.memory_space<vmem>>, vector<24x128xbf16>
    %c0_1 = arith.constant 0 : index
    %c0_2 = arith.constant 0 : index
    %1 = vector.load %arg2[%c0_1, %c0_2] : memref<128x256xbf16, #tpu.memory_space<vmem>>, vector<128x256xbf16>
    %cst = arith.constant dense<0.000000e+00> : vector<24x256xf32>
    %2 = tpu.matmul %0, %1, %cst {dimension_numbers = #tpu.dot_dimension_numbers<[1], [0], [0], [1], [0, 0, 1, 1], [], []>} : vector<24x128xbf16>, vector<128x256xbf16>, vector<24x256xf32> -> vector<24x256xf32>
    %c0_3 = arith.constant 0 : index
    %c0_4 = arith.constant 0 : index
    %3 = vector.load %arg3[%c0_3, %c0_4] : memref<1x256xf32, #tpu.memory_space<vmem>>, vector<1x256xf32>
    %4 = vector.broadcast %3 : vector<1x256xf32> to vector<24x256xf32>
    %5 = arith.addf %2, %4 : vector<24x256xf32>
    %cst_5 = arith.constant 5.000000e-01 : f32
    %6 = vector.broadcast %cst_5 : f32 to vector<24x256xf32>
    %7 = arith.mulf %6, %5 : vector<24x256xf32>
    %cst_6 = arith.constant 4.471500e-02 : f32
    %8 = vector.broadcast %cst_6 : f32 to vector<24x256xf32>
    %9 = arith.mulf %8, %5 : vector<24x256xf32>
    %10 = arith.mulf %9, %5 : vector<24x256xf32>
    %11 = arith.mulf %10, %5 : vector<24x256xf32>
    %12 = arith.addf %5, %11 : vector<24x256xf32>
    %cst_7 = arith.constant 0.797884583 : f32
    %13 = vector.broadcast %cst_7 : f32 to vector<24x256xf32>
    %14 = arith.mulf %13, %12 : vector<24x256xf32>
    %15 = math.tanh %14 : vector<24x256xf32>
    %cst_8 = arith.constant 1.000000e+00 : f32
    %16 = vector.broadcast %cst_8 : f32 to vector<24x256xf32>
    %17 = arith.addf %16, %15 : vector<24x256xf32>
    %18 = arith.mulf %7, %17 : vector<24x256xf32>
    %19 = arith.truncf %18 : vector<24x256xf32> to vector<24x256xbf16>
    %c0_9 = arith.constant 0 : index
    %c0_10 = arith.constant 0 : index
    %20 = vector.load %arg4[%c0_9, %c0_10] : memref<256x128xbf16, #tpu.memory_space<vmem>>, vector<256x128xbf16>
    %cst_11 = arith.constant dense<0.000000e+00> : vector<24x128xf32>
    %21 = tpu.matmul %19, %20, %cst_11 {dimension_numbers = #tpu.dot_dimension_numbers<[1], [0], [0], [1], [0, 0, 1, 1], [], []>} : vector<24x256xbf16>, vector<256x128xbf16>, vector<24x128xf32> -> vector<24x128xf32>
    %c0_12 = arith.constant 0 : index
    %c0_13 = arith.constant 0 : index
    %22 = vector.load %arg5[%c0_12, %c0_13] : memref<1x128xf32, #tpu.memory_space<vmem>>, vector<1x128xf32>
    %23 = vector.broadcast %22 : vector<1x128xf32> to vector<24x128xf32>
    %24 = arith.addf %21, %23 : vector<24x128xf32>
    %c0_14 = arith.constant 0 : index
    %c0_15 = arith.constant 0 : index
    %25 = vector.load %arg6[%c0_14, %c0_15] : memref<24x128xf32, #tpu.memory_space<vmem>>, vector<24x128xf32>
    tpu.vector_store %arg6[%c0_14, %c0_15], %24 {strides = array<i32>} : memref<24x128xf32, #tpu.memory_space<vmem>>, vector<24x128xf32>,
    return
  }
  func.func @transform_0(%arg0: i32) -> (i32, i32) {
    %c0_i32 = arith.constant 0 : i32
    %c0_i32_0 = arith.constant 0 : i32
    return %arg0, %c0_i32 : i32, i32
  }
  func.func @transform_1(%arg0: i32) -> (i32, i32) {
    %c0_i32 = arith.constant 0 : i32
    %c0_i32_0 = arith.constant 0 : i32
    %c0_i32_1 = arith.constant 0 : i32
    return %c0_i32, %c0_i32_0 : i32, i32
  }
  func.func @transform_2(%arg0: i32) -> (i32, i32) {
    %c0_i32 = arith.constant 0 : i32
    %c0_i32_0 = arith.constant 0 : i32
    %c0_i32_1 = arith.constant 0 : i32
    return %c0_i32, %c0_i32_0 : i32, i32
  }
  func.func @transform_3(%arg0: i32) -> (i32, i32) {
    %c0_i32 = arith.constant 0 : i32
    %c0_i32_0 = arith.constant 0 : i32
    %c0_i32_1 = arith.constant 0 : i32
    return %c0_i32, %c0_i32_0 : i32, i32
  }
  func.func @transform_4(%arg0: i32) -> (i32, i32) {
    %c0_i32 = arith.constant 0 : i32
    %c0_i32_0 = arith.constant 0 : i32
    %c0_i32_1 = arith.constant 0 : i32
    return %c0_i32, %c0_i32_0 : i32, i32
  }
  func.func @transform_5(%arg0: i32) -> (i32, i32) {
    %c0_i32 = arith.constant 0 : i32
    %c0_i32_0 = arith.constant 0 : i32
    return %arg0, %c0_i32 : i32, i32
  }
}

</mosaic_0001>

<llo_original>
// kernel: tpu_custom_call.1
$region0: #{tpu_custom_call.1}
  #allocation0 [shape = 'u32[]', space=smem, size = 0x4, offset = 0x4, fixed_abs, tag = 'smem constant byte address 0x4 - core index']
  #allocation1 [shape = 'u32[72,128]{1,0:T(1,128)}', space=vmem, size = 0x9000, scoped, tag = 'internal scratch']
  %s0 = inlined_call_operand.hbm [shape: bf16[34,128], index: 0, kind: input, shape index: {}]
  %s1 = inlined_call_operand.hbm [shape: bf16[128,256], index: 1, kind: input, shape index: {}]
  %s2 = inlined_call_operand.hbm [shape: f32[1,256], index: 2, kind: input, shape index: {}]
  %s3 = inlined_call_operand.hbm [shape: bf16[256,128], index: 3, kind: input, shape index: {}]
  %s4 = inlined_call_operand.vmem [shape: f32[1,128], index: 4, kind: input, shape index: {}]
  %s5 = inlined_call_operand.hbm [shape: f32[34,128], index: 5, kind: output, shape index: {}]
  %s6 = sld [smem:[#allocation0]]
  $region69: #{tpu_custom_call.1} parent=0
    _
  %s8 = ssub.s32 1, %s6
  %s9 = scalar_select 0, %s8, %s6
  $region1: #{tpu_custom_call.1} parent=0
    #allocation2 [shape = 'u8[12288]{0}', space=vmem, size = 0x3000, scoped, tag = 'input window, operand 0']
    #allocation3 [shape = 's32[2]{0}', space=sflag, size = 0x8, scoped, tag = 'scoped memory for tpu_custom_call.1']
    #allocation4 [shape = 's32[2]{0}', space=sflag, size = 0x8, scoped, tag = 'scoped memory for tpu_custom_call.1']
    #allocation5 [shape = 'u8[65536]{0}', space=vmem, size = 0x10000, scoped, tag = 'input window, operand 1, single buffered']
    #allocation6 [shape = 's32[1]{0}', space=sflag, size = 0x4, scoped, tag = 'scoped memory for tpu_custom_call.1']
    #allocation7 [shape = 'u8[1024]{0}', space=vmem, size = 0x400, scoped, tag = 'input window, operand 2, single buffered']
    #allocation8 [shape = 'u8[65536]{0}', space=vmem, size = 0x10000, scoped, tag = 'input window, operand 3, single buffered']
    #allocation9 [shape = 's32[1]{0}', space=sflag, size = 0x4, scoped, tag = 'scoped memory for tpu_custom_call.1']
    #allocation10 [shape = 'u8[24576]{0}', space=vmem, size = 0x6000, scoped, tag = 'output window, operand 0']
    %10 = vsyncpa [#allocation3], 0
    %s11 = scalar_lea.sflag [#allocation3], 1
    %12 = vsyncpa %s11, 0
    %13 = vsyncpa [#allocation6], 0
    %14 = vsyncpa [#allocation9], 0
    %15 = vsyncpa [#allocation4], 0
    %s16 = scalar_lea.sflag [#allocation4], 1
    %17 = vsyncpa %s16, 0
    loop: start=0, step=1, limit=4
    $region2: #{tpu_custom_call.1} parent=1 // loop_pre_header
      _
    $region3: #{tpu_custom_call.1} parent=1 // loop_header
      %s19 = sphi 0, %s23
      %p20 = scmp.ge.s32.totalorder %s19, 4
      %s29 = sphi 0, %s31
      %s32 = sphi 0, %s29
      %s33 = sphi 0, %s32
      %s49 = sphi 0, %s33
      %s53 = sphi 0, %s53
      %s55 = sphi 0, %s53
      %s56 = sphi 0, %s55
      %s70 = sphi 0, %s56
      %s74 = sphi 0, %s74
      %s76 = sphi 0, %s74
      %s77 = sphi 0, %s76
      %s91 = sphi 0, %s77
      %s95 = sphi 0, %s95
      %s97 = sphi 0, %s95
      %s98 = sphi 0, %s97
      %s112 = sphi 0, %s98
      %s116 = sphi 0, %s116
      %s118 = sphi 0, %s116
      %s119 = sphi 0, %s118
      %s133 = sphi 0, %s119
      %s139 = sphi 0, %s141
      %s142 = sphi 0, %s139
      %s143 = sphi 0, %s142
      %s159 = sphi 0, %s143
    $region4: #{tpu_custom_call.1} parent=1 // loop_header_branch
      %22 = sbr.rel (%p20) target = $region8
    $region5: #{tpu_custom_call.1} parent=1 // loop_body
      %s24 = ssub.s32 %s19, 1
      %s25 = ssub.s32 %s19, 2
      %s26 = sadd.s32 %s19, 1
      %s27 = ssub.s32 %s19, %s26
      %p28 = scmp.eq.s32.totalorder %s27, 0
      %s30 = sadd.s32 %s29, 1
      %s31 = scalar_select %p28, %s29, %s30
      %p34 = pneg %p28
      %p35 = scmp.eq.s32.totalorder %s19, 1
      %p36 = por %p34, %p35
      %p37 = scmp.ne.s32.totalorder %s29, %s32
      %p38 = scmp.eq.s32.totalorder %s19, 0
      %p39 = por %p37, %p38
      %p40 = scmp.ne.s32.totalorder %s29, %s32
      %p41 = scmp.eq.s32.totalorder %s24, 1
      %p42 = por %p40, %p41
      %p43 = scmp.ne.s32.totalorder %s32, %s33
      %p44 = scmp.eq.s32.totalorder %s24, 0
      %p45 = por %p43, %p44
      %p46 = scmp.ne.s32.totalorder %s32, %s33
      %p47 = scmp.eq.s32.totalorder %s25, 1
      %p48 = por %p46, %p47
      %p50 = scmp.ne.s32.totalorder %s33, %s49
      %p51 = scmp.eq.s32.totalorder %s25, 0
      %p52 = por %p50, %p51
      %s54 = sadd.s32 %s53, 1
      %p57 = scmp.eq.s32.totalorder %s19, 1
      %p58 = scmp.ne.s32.totalorder %s53, %s55
      %p59 = scmp.eq.s32.totalorder %s19, 0
      %p60 = por %p58, %p59
      %p61 = scmp.ne.s32.totalorder %s53, %s55
      %p62 = scmp.eq.s32.totalorder %s24, 1
      %p63 = por %p61, %p62
      %p64 = scmp.ne.s32.totalorder %s55, %s56
      %p65 = scmp.eq.s32.totalorder %s24, 0
      %p66 = por %p64, %p65
      %p67 = scmp.ne.s32.totalorder %s55, %s56
      %p68 = scmp.eq.s32.totalorder %s25, 1
      %p69 = por %p67, %p68
      %p71 = scmp.ne.s32.totalorder %s56, %s70
      %p72 = scmp.eq.s32.totalorder %s25, 0
      %p73 = por %p71, %p72
      %s75 = sadd.s32 %s74, 1
      %p78 = scmp.eq.s32.totalorder %s19, 1
      %p79 = scmp.ne.s32.totalorder %s74, %s76
      %p80 = scmp.eq.s32.totalorder %s19, 0
      %p81 = por %p79, %p80
      %p82 = scmp.ne.s32.totalorder %s74, %s76
      %p83 = scmp.eq.s32.totalorder %s24, 1
      %p84 = por %p82, %p83
      %p85 = scmp.ne.s32.totalorder %s76, %s77
      %p86 = scmp.eq.s32.totalorder %s24, 0
      %p87 = por %p85, %p86
      %p88 = scmp.ne.s32.totalorder %s76, %s77
      %p89 = scmp.eq.s32.totalorder %s25, 1
      %p90 = por %p88, %p89
      %p92 = scmp.ne.s32.totalorder %s77, %s91
      %p93 = scmp.eq.s32.totalorder %s25, 0
      %p94 = por %p92, %p93
      %s96 = sadd.s32 %s95, 1
      %p99 = scmp.eq.s32.totalorder %s19, 1
      %p100 = scmp.ne.s32.totalorder %s95, %s97
      %p101 = scmp.eq.s32.totalorder %s19, 0
      %p102 = por %p100, %p101
      %p103 = scmp.ne.s32.totalorder %s95, %s97
      %p104 = scmp.eq.s32.totalorder %s24, 1
      %p105 = por %p103, %p104
      %p106 = scmp.ne.s32.totalorder %s97, %s98
      %p107 = scmp.eq.s32.totalorder %s24, 0
      %p108 = por %p106, %p107
      %p109 = scmp.ne.s32.totalorder %s97, %s98
      %p110 = scmp.eq.s32.totalorder %s25, 1
      %p111 = por %p109, %p110
      %p113 = scmp.ne.s32.totalorder %s98, %s112
      %p114 = scmp.eq.s32.totalorder %s25, 0
      %p115 = por %p113, %p114
      %s117 = sadd.s32 %s116, 1
      %p120 = scmp.eq.s32.totalorder %s19, 1
      %p121 = scmp.ne.s32.totalorder %s116, %s118
      %p122 = scmp.eq.s32.totalorder %s19, 0
      %p123 = por %p121, %p122
      %p124 = scmp.ne.s32.totalorder %s116, %s118
      %p125 = scmp.eq.s32.totalorder %s24, 1
      %p126 = por %p124, %p125
      %p127 = scmp.ne.s32.totalorder %s118, %s119
      %p128 = scmp.eq.s32.totalorder %s24, 0
      %p129 = por %p127, %p128
      %p130 = scmp.ne.s32.totalorder %s118, %s119
      %p131 = scmp.eq.s32.totalorder %s25, 1
      %p132 = por %p130, %p131
      %p134 = scmp.ne.s32.totalorder %s119, %s133
      %p135 = scmp.eq.s32.totalorder %s25, 0
      %p136 = por %p134, %p135
      %s137 = ssub.s32 %s19, %s26
      %p138 = scmp.eq.s32.totalorder %s137, 0
      %s140 = sadd.s32 %s139, 1
      %s141 = scalar_select %p138, %s139, %s140
      %p144 = pneg %p138
      %p145 = scmp.eq.s32.totalorder %s19, 1
      %p146 = por %p144, %p145
      %p147 = scmp.ne.s32.totalorder %s139, %s142
      %p148 = scmp.eq.s32.totalorder %s19, 0
      %p149 = por %p147, %p148
      %p150 = scmp.ne.s32.totalorder %s139, %s142
      %p151 = scmp.eq.s32.totalorder %s24, 1
      %p152 = por %p150, %p151
      %p153 = scmp.ne.s32.totalorder %s142, %s143
      %p154 = scmp.eq.s32.totalorder %s24, 0
      %p155 = por %p153, %p154
      %p156 = scmp.ne.s32.totalorder %s142, %s143
      %p157 = scmp.eq.s32.totalorder %s25, 1
      %p158 = por %p156, %p157
      %p160 = scmp.ne.s32.totalorder %s143, %s159
      %p161 = scmp.eq.s32.totalorder %s25, 0
      %p162 = por %p160, %p161
      %p163 = scmp.le.s32.totalorder 1, %s19
      %p164 = scmp.lt.s32.totalorder %s19, 3
      %p165 = pnand %p163, %p164
      %p166 = pneg %p165
      // Predicated region
      $region9: #{tpu_custom_call.1} parent=5 // pred_check
        _
      $region10: #{tpu_custom_call.1} parent=5 // pred_check_branch
        %168 = sbr.rel (%p165) target = $region12
      $region11: #{tpu_custom_call.1} parent=5 // pred_region
        %s169 = ssub.s32 %s19, 1
        // Predicated region
        $region13: #{tpu_custom_call.1} parent=11 // pred_check
          %p170 = pneg %p66
        $region14: #{tpu_custom_call.1} parent=11 // pred_check_branch
          %172 = sbr.rel (%p170) target = $region16
        $region15: #{tpu_custom_call.1} parent=11 // pred_region
          %174 = vsyncadd [#allocation6], 0
          %s175 = sshll.u32 %s1, 4
          %s176 = int_to_ptr.hbm [resolvable:$true] %s175
          %s177 = sshll.u32 [#allocation5], 4
          %s178 = int_to_ptr.vmem [resolvable:$true] %s177
          %183 = dma.hbm_to_vmem [thread:$0]  %s176, 2048, %s178, [#allocation6], 128, 128, 8
        $region16: #{tpu_custom_call.1} parent=11 // pred_fallthru
          _
        // Predicated region
        $region17: #{tpu_custom_call.1} parent=11 // pred_check
          %p184 = pneg %p87
        $region18: #{tpu_custom_call.1} parent=11 // pred_check_branch
          %186 = sbr.rel (%p184) target = $region20
        $region19: #{tpu_custom_call.1} parent=11 // pred_region
          %188 = vsyncadd [#allocation6], 0
          %s190 = sshll.u32 %s2, 4
          %s191 = int_to_ptr.hbm [resolvable:$true] %s190
          %s192 = sshll.u32 [#allocation7], 4
          %s193 = int_to_ptr.vmem [resolvable:$true] %s192
          %195 = dma.hbm_to_vmem [thread:$0]  %s191, 32, %s193, [#allocation6]
        $region20: #{tpu_custom_call.1} parent=11 // pred_fallthru
          _
        // Predicated region
        $region21: #{tpu_custom_call.1} parent=11 // pred_check
          %p196 = pneg %p108
        $region22: #{tpu_custom_call.1} parent=11 // pred_check_branch
          %198 = sbr.rel (%p196) target = $region24
        $region23: #{tpu_custom_call.1} parent=11 // pred_region
          %200 = vsyncadd [#allocation9], 0
          %s201 = sshll.u32 %s3, 4
          %s202 = int_to_ptr.hbm [resolvable:$true] %s201
          %s203 = sshll.u32 [#allocation8], 4
          %s204 = int_to_ptr.vmem [resolvable:$true] %s203
          %209 = dma.hbm_to_vmem [thread:$0]  %s202, 2048, %s204, [#allocation9], 64, 64, 4
        $region24: #{tpu_custom_call.1} parent=11 // pred_fallthru
          _
        // Predicated region
        $region25: #{tpu_custom_call.1} parent=11 // pred_check
          %p210 = pneg %p129
        $region26: #{tpu_custom_call.1} parent=11 // pred_check_branch
          %212 = sbr.rel (%p210) target = $region28
        $region27: #{tpu_custom_call.1} parent=11 // pred_region
          _
        $region28: #{tpu_custom_call.1} parent=11 // pred_fallthru
          _
      $region12: #{tpu_custom_call.1} parent=5 // pred_fallthru
        _
      %p213 = scmp.lt.s32.totalorder %s19, 2
      // Predicated region
      $region29: #{tpu_custom_call.1} parent=5 // pred_check
        %p214 = pneg %p213
      $region30: #{tpu_custom_call.1} parent=5 // pred_check_branch
        %216 = sbr.rel (%p214) target = $region32
      $region31: #{tpu_custom_call.1} parent=5 // pred_region
        // Predicated region
        $region33: #{tpu_custom_call.1} parent=31 // pred_check
          %p217 = pneg %p39
        $region34: #{tpu_custom_call.1} parent=31 // pred_check_branch
          %219 = sbr.rel (%p217) target = $region36
        $region35: #{tpu_custom_call.1} parent=31 // pred_region
          %s220 = sand.u32 %s29, 1
          %s221 = scalar_lea.sflag [#allocation3], %s220
          %s222 = sand.u32 %s29, 1
          %s223 = smul.addr %s222, 12
          %s224 = scalar_lea.vmem [#allocation2], %s223
          %s225 = smul.u32 3, %s19
          %s226 = ssub.s32 5, %s225
          %p227 = scmp.lt.s32.totalorder %s226, 3
          %s228 = scalar_select %p227, %s226, 3
          %s229 = smul.u32 4, %s228
          %s230 = ssub.s32 12, %s229
          %s231 = sshll.u32 %s230, 4
          %232 = vsyncadd %s221, %s231
          %p233 = scmp.ne.s32.totalorder 0, %s229
          %s234 = smul.addr %s225, 4
          %s235 = scalar_lea.hbm %s0, %s234
          %s236 = smul.u32 4, %s228
          %s237 = sshll.u32 %s235, 4
          %s238 = int_to_ptr.hbm [resolvable:$true] %s237
          %s239 = sshll.u32 %s224, 4
          %s240 = int_to_ptr.vmem [resolvable:$true] %s239
          %s241 = sshll.u32 %s236, 4
          %245 = dma.hbm_to_vmem [thread:$0]  (%p233), %s238, %s241, %s240, %s221, 64, 64, 4
        $region36: #{tpu_custom_call.1} parent=31 // pred_fallthru
          _
      $region32: #{tpu_custom_call.1} parent=5 // pred_fallthru
        _
      %p246 = scmp.le.s32.totalorder 1, %s19
      %p247 = scmp.lt.s32.totalorder %s19, 3
      %p248 = pnand %p246, %p247
      %p249 = pneg %p248
      // Predicated region
      $region37: #{tpu_custom_call.1} parent=5 // pred_check
        _
      $region38: #{tpu_custom_call.1} parent=5 // pred_check_branch
        %251 = sbr.rel (%p248) target = $region40
      $region39: #{tpu_custom_call.1} parent=5 // pred_region
        %s252 = ssub.s32 %s19, 1
        %s253 = sand.u32 %s32, 1
        %s254 = scalar_lea.sflag [#allocation3], %s253
        %s255 = sand.u32 %s32, 1
        %s256 = smul.addr %s255, 12
        %s257 = scalar_lea.vmem [#allocation2], %s256
        // Predicated region
        $region41: #{tpu_custom_call.1} parent=39 // pred_check
          %p258 = pneg %p45
        $region42: #{tpu_custom_call.1} parent=39 // pred_check_branch
          %260 = sbr.rel (%p258) target = $region44
        $region43: #{tpu_custom_call.1} parent=39 // pred_region
          %262 = dma.done %s254, 192
        $region44: #{tpu_custom_call.1} parent=39 // pred_fallthru
          _
        // Predicated region
        $region45: #{tpu_custom_call.1} parent=39 // pred_check
          %p263 = pneg %p66
        $region46: #{tpu_custom_call.1} parent=39 // pred_check_branch
          %265 = sbr.rel (%p263) target = $region48
        $region47: #{tpu_custom_call.1} parent=39 // pred_region
          %267 = dma.done [#allocation6], 2048
        $region48: #{tpu_custom_call.1} parent=39 // pred_fallthru
          _
        // Predicated region
        $region49: #{tpu_custom_call.1} parent=39 // pred_check
          %p268 = pneg %p87
        $region50: #{tpu_custom_call.1} parent=39 // pred_check_branch
          %270 = sbr.rel (%p268) target = $region52
        $region51: #{tpu_custom_call.1} parent=39 // pred_region
          %272 = dma.done [#allocation6], 32
        $region52: #{tpu_custom_call.1} parent=39 // pred_fallthru
          _
        // Predicated region
        $region53: #{tpu_custom_call.1} parent=39 // pred_check
          %p273 = pneg %p108
        $region54: #{tpu_custom_call.1} parent=39 // pred_check_branch
          %275 = sbr.rel (%p273) target = $region56
        $region55: #{tpu_custom_call.1} parent=39 // pred_region
          %277 = dma.done [#allocation9], 2048
        $region56: #{tpu_custom_call.1} parent=39 // pred_fallthru
          _
        %s278 = sand.u32 %s32, 1
        %s279 = scalar_lea.sflag [#allocation3], %s278
        %s280 = sand.u32 %s32, 1
        %s281 = smul.addr %s280, 12
        %s282 = scalar_lea.vmem [#allocation2], %s281
        %p283 = pneg %p45
        %p284 = pneg %p42
        %p285 = pneg %p66
        %p286 = pneg %p63
        %p287 = pneg %p87
        %p288 = pneg %p84
        %p289 = pneg %p108
        %p290 = pneg %p105
        %p291 = pneg %p129
        %p292 = pneg %p126
        %p293 = pneg %p155
        %p294 = pneg %p152
        %s295 = sand.u32 %s142, 1
        %s296 = scalar_lea.sflag [#allocation4], %s295
        %s297 = sand.u32 %s142, 1
        %s298 = smul.addr %s297, 24
        %s299 = scalar_lea.vmem [#allocation10], %s298
        %s300 = smul.u32 3, %s24
        %s301 = ssub.s32 5, %s300
        %p302 = scmp.lt.s32.totalorder %s301, 3
        %s303 = scalar_select %p302, %s301, 3
        %s304 = smul.u32 4, %s303
        %s305 = smul.u32 3, %s24
        %s306 = ssub.s32 5, %s305
        %p307 = scmp.lt.s32.totalorder %s306, 3
        %s308 = scalar_select %p307, %s306, 3
        %s309 = smul.u32 8, %s308
        %v310 = vld [vmem:[%s257] sm:$0xf]
        %v311 = vld [vmem:[%s257 + $0x4] sm:$0xf]
        %v312 = vld [vmem:[%s257 + $0x8] sm:$0xf]
        %v313 = vld [vmem:[#allocation5] sm:$0xff]
        %v314 = vld [vmem:[#allocation5 + $0x8] sm:$0xff]
        %v315 = vld [vmem:[#allocation5 + $0x10] sm:$0xff]
        %v316 = vld [vmem:[#allocation5 + $0x18] sm:$0xff]
        %v317 = vld [vmem:[#allocation5 + $0x20] sm:$0xff]
        %v318 = vld [vmem:[#allocation5 + $0x28] sm:$0xff]
        %v319 = vld [vmem:[#allocation5 + $0x30] sm:$0xff]
        %v320 = vld [vmem:[#allocation5 + $0x38] sm:$0xff]
        %v321 = vld [vmem:[#allocation5 + $0x40] sm:$0xff]
        %v322 = vld [vmem:[#allocation5 + $0x48] sm:$0xff]
        %v323 = vld [vmem:[#allocation5 + $0x50] sm:$0xff]
        %v324 = vld [vmem:[#allocation5 + $0x58] sm:$0xff]
        %v325 = vld [vmem:[#allocation5 + $0x60] sm:$0xff]
        %v326 = vld [vmem:[#allocation5 + $0x68] sm:$0xff]
        %v327 = vld [vmem:[#allocation5 + $0x70] sm:$0xff]
        %v328 = vld [vmem:[#allocation5 + $0x78] sm:$0xff]
        %v329 = vld [vmem:[#allocation7] sm:$0x3]
        %v331 = vperm.slane %v329, 0
        %v332 = vperm.slane %v329, 1
        %v338 = vunpack.c.l.b16 %v310
        %v339 = vunpack.c.l.b16 %v311
        %v340 = vunpack.c.l.b16 %v312
        %v341 = vpack.c.b16 %v339, %v338
        %v342 = vpack.c.b16 %v340, %v340
        %v361 = vunpack.c.l.b16 %v313
        %v362 = vunpack.c.h.b16 %v313
        %v363 = vunpack.c.l.b16 %v314
        %v364 = vunpack.c.h.b16 %v314
        %v365 = vunpack.c.l.b16 %v315
        %v366 = vunpack.c.h.b16 %v315
        %v367 = vunpack.c.l.b16 %v316
        %v368 = vunpack.c.h.b16 %v316
        %v369 = vunpack.c.l.b16 %v317
        %v370 = vunpack.c.h.b16 %v317
        %v371 = vunpack.c.l.b16 %v318
        %v372 = vunpack.c.h.b16 %v318
        %v373 = vunpack.c.l.b16 %v319
        %v374 = vunpack.c.h.b16 %v319
        %v375 = vunpack.c.l.b16 %v320
        %v376 = vunpack.c.h.b16 %v320
        %v377 = vunpack.c.l.b16 %v321
        %v378 = vunpack.c.h.b16 %v321
        %v379 = vunpack.c.l.b16 %v322
        %v380 = vunpack.c.h.b16 %v322
        %v381 = vunpack.c.l.b16 %v323
        %v382 = vunpack.c.h.b16 %v323
        %v383 = vunpack.c.l.b16 %v324
        %v384 = vunpack.c.h.b16 %v324
        %v385 = vunpack.c.l.b16 %v325
        %v386 = vunpack.c.h.b16 %v325
        %v387 = vunpack.c.l.b16 %v326
        %v388 = vunpack.c.h.b16 %v326
        %v389 = vunpack.c.l.b16 %v327
        %v390 = vunpack.c.h.b16 %v327
        %v391 = vunpack.c.l.b16 %v328
        %v392 = vunpack.c.h.b16 %v328
        %v393 = vpack.c.b16 %v363, %v361
        %v394 = vpack.c.b16 %v364, %v362
        %v395 = vpack.c.b16 %v367, %v365
        %v396 = vpack.c.b16 %v368, %v366
        %v397 = vpack.c.b16 %v371, %v369
        %v398 = vpack.c.b16 %v372, %v370
        %v399 = vpack.c.b16 %v375, %v373
        %v400 = vpack.c.b16 %v376, %v374
        %v401 = vpack.c.b16 %v379, %v377
        %v402 = vpack.c.b16 %v380, %v378
        %v403 = vpack.c.b16 %v383, %v381
        %v404 = vpack.c.b16 %v384, %v382
        %v405 = vpack.c.b16 %v387, %v385
        %v406 = vpack.c.b16 %v388, %v386
        %v407 = vpack.c.b16 %v391, %v389
        %v408 = vpack.c.b16 %v392, %v390
        %425 = vmatpush.bf16.msra.mxu0 %v407
        %426 = vmatpush.bf16.msra.mxu0 %v405
        %427 = vmatpush.bf16.msra.mxu0 %v403
        %428 = vmatpush.bf16.msra.mxu0 %v401
        %429 = vmatpush.bf16.msra.mxu0 %v399
        %430 = vmatpush.bf16.msra.mxu0 %v397
        %431 = vmatpush.bf16.msra.mxu0 %v395
        %432 = vmatpush.bf16.msra.mxu0 %v393
        %433 = vmatmul.bf16.gmra.mxu0 %v341
        %v434 = vpop.f32.mrf.mxu0
        %v435 = vadd.f32 %v331, %v434
        %v436 = vpop.f32.mrf.mxu0
        %v437 = vadd.f32 %v331, %v436
        %438 = vmatmul.bf16.gmra.mxu0 %v342
        %v439 = vpop.f32.mrf.mxu0
        %v440 = vadd.f32 %v331, %v439
        %v441 = vpop.f32.mrf.mxu0
        %442 = vdwg.mxu0
        %443 = vmatpush.bf16.msra.mxu0 %v408
        %444 = vmatpush.bf16.msra.mxu0 %v406
        %445 = vmatpush.bf16.msra.mxu0 %v404
        %446 = vmatpush.bf16.msra.mxu0 %v402
        %447 = vmatpush.bf16.msra.mxu0 %v400
        %448 = vmatpush.bf16.msra.mxu0 %v398
        %449 = vmatpush.bf16.msra.mxu0 %v396
        %450 = vmatpush.bf16.msra.mxu0 %v394
        %451 = vmatmul.bf16.gmra.mxu0 %v341
        %v452 = vpop.f32.mrf.mxu0
        %v453 = vadd.f32 %v332, %v452
        %v454 = vpop.f32.mrf.mxu0
        %v455 = vadd.f32 %v332, %v454
        %456 = vmatmul.bf16.gmra.mxu0 %v342
        %v457 = vpop.f32.mrf.mxu0
        %v458 = vadd.f32 %v332, %v457
        %v459 = vpop.f32.mrf.mxu0
        %460 = vdwg.mxu0
        %v461 = vmul.f32 %v435, 0.5
        %v462 = vmul.f32 %v453, 0.5
        %v463 = vmul.f32 %v437, 0.5
        %v464 = vmul.f32 %v455, 0.5
        %v465 = vmul.f32 %v440, 0.5
        %v466 = vmul.f32 %v458, 0.5
        %v467 = vmul.f32 %v435, 0.044715
        %v468 = vmul.f32 %v453, 0.044715
        %v469 = vmul.f32 %v437, 0.044715
        %v470 = vmul.f32 %v455, 0.044715
        %v471 = vmul.f32 %v440, 0.044715
        %v472 = vmul.f32 %v458, 0.044715
        %v473 = vmul.f32 %v467, %v435
        %v474 = vmul.f32 %v468, %v453
        %v475 = vmul.f32 %v469, %v437
        %v476 = vmul.f32 %v470, %v455
        %v477 = vmul.f32 %v471, %v440
        %v478 = vmul.f32 %v472, %v458
        %v479 = vmul.f32 %v473, %v435
        %v480 = vmul.f32 %v474, %v453
        %v481 = vmul.f32 %v475, %v437
        %v482 = vmul.f32 %v476, %v455
        %v483 = vmul.f32 %v477, %v440
        %v484 = vmul.f32 %v478, %v458
        %v485 = vadd.f32 %v435, %v479
        %v486 = vadd.f32 %v453, %v480
        %v487 = vadd.f32 %v437, %v481
        %v488 = vadd.f32 %v455, %v482
        %v489 = vadd.f32 %v440, %v483
        %v490 = vadd.f32 %v458, %v484
        %v491 = vmul.f32 %v485, 0.7978846
        %v492 = vmul.f32 %v486, 0.7978846
        %v493 = vmul.f32 %v487, 0.7978846
        %v494 = vmul.f32 %v488, 0.7978846
        %v495 = vmul.f32 %v489, 0.7978846
        %v496 = vmul.f32 %v490, 0.7978846
        %v497 = vtanh.pop %v491
        %v498 = vtanh.pop %v492
        %v499 = vtanh.pop %v493
        %v500 = vtanh.pop %v494
        %v501 = vtanh.pop %v495
        %v502 = vtanh.pop %v496
        %v503 = vadd.f32 %v497, 1.0
        %v504 = vadd.f32 %v498, 1.0
        %v505 = vadd.f32 %v499, 1.0
        %v506 = vadd.f32 %v500, 1.0
        %v507 = vadd.f32 %v501, 1.0
        %v508 = vadd.f32 %v502, 1.0
        %v509 = vmul.f32 %v461, %v503
        %v510 = vmul.f32 %v462, %v504
        %v511 = vmul.f32 %v463, %v505
        %v512 = vmul.f32 %v464, %v506
        %v513 = vmul.f32 %v465, %v507
        %v514 = vmul.f32 %v466, %v508
        %v515 = vpack.c.bf16 %v511, %v509
        %v516 = vpack.c.bf16 %v512, %v510
        %v517 = vpack.c.bf16 %v513, %v513
        %v518 = vpack.c.bf16 %v514, %v514
        %v519 = vld [vmem:[#allocation8] sm:$0xf]
        %v520 = vld [vmem:[#allocation8 + $0x4] sm:$0xf]
        %v521 = vld [vmem:[#allocation8 + $0x8] sm:$0xf]
        %v522 = vld [vmem:[#allocation8 + $0xc] sm:$0xf]
        %v523 = vld [vmem:[#allocation8 + $0x10] sm:$0xf]
        %v524 = vld [vmem:[#allocation8 + $0x14] sm:$0xf]
        %v525 = vld [vmem:[#allocation8 + $0x18] sm:$0xf]
        %v526 = vld [vmem:[#allocation8 + $0x1c] sm:$0xf]
        %v527 = vld [vmem:[#allocation8 + $0x20] sm:$0xf]
        %v528 = vld [vmem:[#allocation8 + $0x24] sm:$0xf]
        %v529 = vld [vmem:[#allocation8 + $0x28] sm:$0xf]
        %v530 = vld [vmem:[#allocation8 + $0x2c] sm:$0xf]
        %v531 = vld [vmem:[#allocation8 + $0x30] sm:$0xf]
        %v532 = vld [vmem:[#allocation8 + $0x34] sm:$0xf]
        %v533 = vld [vmem:[#allocation8 + $0x38] sm:$0xf]
        %v534 = vld [vmem:[#allocation8 + $0x3c] sm:$0xf]
        %v535 = vld [vmem:[#allocation8 + $0x40] sm:$0xf]
        %v536 = vld [vmem:[#allocation8 + $0x44] sm:$0xf]
        %v537 = vld [vmem:[#allocation8 + $0x48] sm:$0xf]
        %v538 = vld [vmem:[#allocation8 + $0x4c] sm:$0xf]
        %v539 = vld [vmem:[#allocation8 + $0x50] sm:$0xf]
        %v540 = vld [vmem:[#allocation8 + $0x54] sm:$0xf]
        %v541 = vld [vmem:[#allocation8 + $0x58] sm:$0xf]
        %v542 = vld [vmem:[#allocation8 + $0x5c] sm:$0xf]
        %v543 = vld [vmem:[#allocation8 + $0x60] sm:$0xf]
        %v544 = vld [vmem:[#allocation8 + $0x64] sm:$0xf]
        %v545 = vld [vmem:[#allocation8 + $0x68] sm:$0xf]
        %v546 = vld [vmem:[#allocation8 + $0x6c] sm:$0xf]
        %v547 = vld [vmem:[#allocation8 + $0x70] sm:$0xf]
        %v548 = vld [vmem:[#allocation8 + $0x74] sm:$0xf]
        %v549 = vld [vmem:[#allocation8 + $0x78] sm:$0xf]
        %v550 = vld [vmem:[#allocation8 + $0x7c] sm:$0xf]
        %v551 = vld [vmem:[%s4] sm:$0x1]
        %v553 = vperm.slane %v551, 0
        %v587 = vunpack.c.l.b16 %v519
        %v588 = vunpack.c.l.b16 %v520
        %v589 = vunpack.c.l.b16 %v521
        %v590 = vunpack.c.l.b16 %v522
        %v591 = vunpack.c.l.b16 %v523
        %v592 = vunpack.c.l.b16 %v524
        %v593 = vunpack.c.l.b16 %v525
        %v594 = vunpack.c.l.b16 %v526
        %v595 = vunpack.c.l.b16 %v527
        %v596 = vunpack.c.l.b16 %v528
        %v597 = vunpack.c.l.b16 %v529
        %v598 = vunpack.c.l.b16 %v530
        %v599 = vunpack.c.l.b16 %v531
        %v600 = vunpack.c.l.b16 %v532
        %v601 = vunpack.c.l.b16 %v533
        %v602 = vunpack.c.l.b16 %v534
        %v603 = vunpack.c.l.b16 %v535
        %v604 = vunpack.c.l.b16 %v536
        %v605 = vunpack.c.l.b16 %v537
        %v606 = vunpack.c.l.b16 %v538
        %v607 = vunpack.c.l.b16 %v539
        %v608 = vunpack.c.l.b16 %v540
        %v609 = vunpack.c.l.b16 %v541
        %v610 = vunpack.c.l.b16 %v542
        %v611 = vunpack.c.l.b16 %v543
        %v612 = vunpack.c.l.b16 %v544
        %v613 = vunpack.c.l.b16 %v545
        %v614 = vunpack.c.l.b16 %v546
        %v615 = vunpack.c.l.b16 %v547
        %v616 = vunpack.c.l.b16 %v548
        %v617 = vunpack.c.l.b16 %v549
        %v618 = vunpack.c.l.b16 %v550
        %v619 = vpack.c.b16 %v588, %v587
        %v620 = vpack.c.b16 %v590, %v589
        %v621 = vpack.c.b16 %v592, %v591
        %v622 = vpack.c.b16 %v594, %v593
        %v623 = vpack.c.b16 %v596, %v595
        %v624 = vpack.c.b16 %v598, %v597
        %v625 = vpack.c.b16 %v600, %v599
        %v626 = vpack.c.b16 %v602, %v601
        %v627 = vpack.c.b16 %v604, %v603
        %v628 = vpack.c.b16 %v606, %v605
        %v629 = vpack.c.b16 %v608, %v607
        %v630 = vpack.c.b16 %v610, %v609
        %v631 = vpack.c.b16 %v612, %v611
        %v632 = vpack.c.b16 %v614, %v613
        %v633 = vpack.c.b16 %v616, %v615
        %v634 = vpack.c.b16 %v618, %v617
        %651 = vmatpush.bf16.msra.mxu0 %v626
        %652 = vmatpush.bf16.msra.mxu0 %v625
        %653 = vmatpush.bf16.msra.mxu0 %v624
        %654 = vmatpush.bf16.msra.mxu0 %v623
        %655 = vmatpush.bf16.msra.mxu0 %v622
        %656 = vmatpush.bf16.msra.mxu0 %v621
        %657 = vmatpush.bf16.msra.mxu0 %v620
        %658 = vmatpush.bf16.msra.mxu0 %v619
        %659 = vmatmul.bf16.gmra.mxu0 %v515
        %v660 = vpop.f32.mrf.mxu0
        %v661 = vadd.f32 %v553, %v660
        %v662 = vpop.f32.mrf.mxu0
        %v663 = vadd.f32 %v553, %v662
        %664 = vmatmul.bf16.gmra.mxu0 %v517
        %v665 = vpop.f32.mrf.mxu0
        %v666 = vadd.f32 %v553, %v665
        %v667 = vpop.f32.mrf.mxu0
        %668 = vdwg.mxu0
        %669 = vmatpush.bf16.msra.mxu0 %v634
        %670 = vmatpush.bf16.msra.mxu0 %v633
        %671 = vmatpush.bf16.msra.mxu0 %v632
        %672 = vmatpush.bf16.msra.mxu0 %v631
        %673 = vmatpush.bf16.msra.mxu0 %v630
        %674 = vmatpush.bf16.msra.mxu0 %v629
        %675 = vmatpush.bf16.msra.mxu0 %v628
        %676 = vmatpush.bf16.msra.mxu0 %v627
        %677 = vmatmul.bf16.gmra.mxu0 %v516
        %v678 = vpop.f32.mrf.mxu0
        %v679 = vadd.f32 %v661, %v678
        %v680 = vpop.f32.mrf.mxu0
        %v681 = vadd.f32 %v663, %v680
        %682 = vmatmul.bf16.gmra.mxu0 %v518
        %v683 = vpop.f32.mrf.mxu0
        %v684 = vadd.f32 %v666, %v683
        %v685 = vpop.f32.mrf.mxu0
        %686 = vdwg.mxu0
        %687 = vst [vmem:[%s299] sm:$0xff] %v679
        %688 = vst [vmem:[%s299 + $0x8] sm:$0xff] %v681
        %689 = vst [vmem:[%s299 + $0x10] sm:$0xff] %v684
        %s690 = sand.u32 %s142, 1
        %s691 = scalar_lea.sflag [#allocation4], %s690
        %s692 = sand.u32 %s142, 1
        %s693 = smul.addr %s692, 24
        %s694 = scalar_lea.vmem [#allocation10], %s693
        // Predicated region
        $region57: #{tpu_custom_call.1} parent=39 // pred_check
          %p695 = pneg %p152
        $region58: #{tpu_custom_call.1} parent=39 // pred_check_branch
          %697 = sbr.rel (%p695) target = $region60
        $region59: #{tpu_custom_call.1} parent=39 // pred_region
          %s698 = smul.u32 3, %s24
          %s699 = ssub.s32 5, %s698
          %p700 = scmp.lt.s32.totalorder %s699, 3
          %s701 = scalar_select %p700, %s699, 3
          %s702 = smul.u32 8, %s701
          %s703 = ssub.s32 24, %s702
          %s704 = sshll.u32 %s703, 4
          %705 = vsyncadd %s691, %s704
          %p706 = scmp.ne.s32.totalorder 0, %s702
          %s707 = smul.addr %s698, 8
          %s708 = scalar_lea.hbm %s5, %s707
          %s709 = smul.u32 8, %s701
          %s710 = sshll.u32 %s694, 4
          %s711 = int_to_ptr.vmem [resolvable:$true] %s710
          %s712 = sshll.u32 %s708, 4
          %s713 = int_to_ptr.hbm [resolvable:$true] %s712
          %s714 = sshll.u32 %s709, 4
          %718 = dma.vmem_to_hbm [thread:$0]  (%p706), %s711, %s714, %s713, %s691, 128, 128, 8
        $region60: #{tpu_custom_call.1} parent=39 // pred_fallthru
          _
      $region40: #{tpu_custom_call.1} parent=5 // pred_fallthru
        _
      %p719 = scmp.le.s32.totalorder 2, %s19
      // Predicated region
      $region61: #{tpu_custom_call.1} parent=5 // pred_check
        %p720 = pneg %p719
      $region62: #{tpu_custom_call.1} parent=5 // pred_check_branch
        %722 = sbr.rel (%p720) target = $region64
      $region63: #{tpu_custom_call.1} parent=5 // pred_region
        %s723 = ssub.s32 %s19, 2
        // Predicated region
        $region65: #{tpu_custom_call.1} parent=63 // pred_check
          %p724 = pneg %p158
        $region66: #{tpu_custom_call.1} parent=63 // pred_check_branch
          %726 = sbr.rel (%p724) target = $region68
        $region67: #{tpu_custom_call.1} parent=63 // pred_region
          %s727 = sand.u32 %s143, 1
          %s728 = scalar_lea.sflag [#allocation4], %s727
          %s729 = sand.u32 %s143, 1
          %s730 = smul.addr %s729, 24
          %s731 = scalar_lea.vmem [#allocation10], %s730
          %733 = dma.done %s728, 384
        $region68: #{tpu_custom_call.1} parent=63 // pred_fallthru
          _
      $region64: #{tpu_custom_call.1} parent=5 // pred_fallthru
        _
    $region6: #{tpu_custom_call.1} parent=1 // loop_footer
      %s23 = sadd.s32 1, %s19
    $region7: #{tpu_custom_call.1} parent=1 // loop_footer_branch
      %18 = sbr.rel target = $region3
    $region8: #{tpu_custom_call.1} parent=1 // loop_exit
      _
    %734 = vsyncpa [#allocation3], 1
    %s735 = scalar_lea.sflag [#allocation3], 1
    %736 = vsyncpa %s735, 1
    %737 = vsyncpa [#allocation6], 1
    %738 = vsyncpa [#allocation9], 1
    %739 = vsyncpa [#allocation4], 1
    %s740 = scalar_lea.sflag [#allocation4], 1
    %741 = vsyncpa %s740, 1

</llo_original>
